<compile_context>
chip_gen: v6e
topology: v6e:2x2x1
jax: 0.10.0
libtpu: 0.0.40
codegen_flags: <defaults>
</compile_context>

<pallas_src>
import functools

import jax
import jax.numpy as jnp
from jax import lax
from jax.experimental import pallas as pl
from jax.experimental.pallas import tpu as pltpu


# ---------------------------------------------------------------------------
# Fused SpatialFiLM kernel: one batch block (bb elements) per grid step.
# ---------------------------------------------------------------------------
def _spatial_film_kernel(x_ref, cond_ref, rha_ref, gk_ref, bias_ref, o_ref):
    bb, H, WCo = x_ref.shape                      # (bb, H, W*Co) lane-dense x block
    cdt = rha_ref.dtype                           # matmul compute dtype (bf16 or f32)

    # --- Stage 1: bilinear row resize, with the 3 kh halo shifts of the 3x3 conv
    #     folded into the row operator rha = [rh_pad[kh:kh+H] for kh in 0..2]. ---
    # Per batch element: (3H, Hc) @ (Hc, Wc*Cc) -> (3H, Wc*Cc), f32 accumulation.
    tmps = [jnp.dot(rha_ref[...], cond_ref[b].astype(cdt),
                    preferred_element_type=jnp.float32)
            for b in range(bb)]

    # --- Stage 2: width resize + 3x3 conv + gamma/beta channel mixing as three
    #     accumulating MXU matmuls with M = bb*H rows (fills the systolic array). ---
    acc = None
    for kh in range(3):
        # kh*H is a multiple of 8 -> sublane-aligned slices; concat stacks batches
        # in the same order as the x rows below.
        rows = jnp.concatenate([t[kh * H:(kh + 1) * H] for t in tmps], axis=0)
        contrib = jnp.dot(rows.astype(cdt), gk_ref[kh],
                          preferred_element_type=jnp.float32)     # (bb*H, 2*W*Co)
        acc = contrib if acc is None else acc + contrib
    gb = acc + bias_ref[...]                       # (bb*H, 2*W*Co), f32

    # --- Stage 3: FiLM.  gamma | beta occupy 128-aligned lane halves of gb. ---
    xs = x_ref[...].reshape(bb * H, WCo)           # contiguous collapse, no data move
    out = gb[:, :WCo] * xs + gb[:, WCo:]
    o_ref[...] = out.reshape(bb, H, WCo).astype(o_ref.dtype)


# ---------------------------------------------------------------------------
# Wrapper-side operator precompute (pure coefficient / layout plumbing).
# ---------------------------------------------------------------------------
def _interp_matrix(out_size, in_size):
    """PyTorch F.interpolate bilinear (align_corners=False) weights as a matrix."""
    # TODO(synk): cross-check these indices against torch.nn.functional.interpolate
    # offline (the in-script reference shares the same src-clamping formula).
    scale = in_size / out_size
    src = (jnp.arange(out_size, dtype=jnp.float32) + 0.5) * scale - 0.5
    src = jnp.maximum(src, 0.0)                               # PyTorch clamps src < 0
    i0 = jnp.clip(jnp.floor(src), 0, in_size - 1).astype(jnp.int32)
    i1 = jnp.minimum(i0 + 1, in_size - 1)
    frac = src - i0.astype(jnp.float32)
    rows = jnp.arange(out_size)
    R = jnp.zeros((out_size, in_size), jnp.float32)
    R = R.at[rows, i0].add(1.0 - frac)
    R = R.at[rows, i1].add(frac)
    return R


def _row_operator(H, Hc):
    """(3H, Hc): row-interp with the conv's zero halo, stacked over the 3 kh taps."""
    rh_pad = jnp.pad(_interp_matrix(H, Hc), ((1, 1), (0, 0)))     # (H+2, Hc)
    return jnp.concatenate([rh_pad[kh:kh + H] for kh in range(3)], axis=0)


def _col_conv_operators(params, W, Wc):
    """G_kh (3, Wc*Cc, 2*W*Co): width interp + kw shift + gamma|beta channel mixing."""
    wg = jnp.transpose(params["wg"], (2, 3, 1, 0)).astype(jnp.float32)  # (3,3,Cc,Co)
    wb = jnp.transpose(params["wb"], (2, 3, 1, 0)).astype(jnp.float32)
    Cc, Co = wg.shape[2], wg.shape[3]
    rw_pad = jnp.pad(_interp_matrix(W, Wc), ((1, 1), (0, 0)))           # (W+2, Wc)
    gks = []
    for kh in range(3):
        g = jnp.zeros((Wc * Cc, 2 * W * Co), jnp.float32)
        for kw in range(3):
            a = rw_pad[kw:kw + W].T                                      # (Wc, W)
            g = g + jnp.concatenate(
                [jnp.kron(a, wg[kh, kw]), jnp.kron(a, wb[kh, kw])], axis=1)
        gks.append(g)
    gk = jnp.stack(gks, axis=0)                                          # (3, Wc*Cc, 2*W*Co)
    bias = jnp.concatenate([jnp.tile(params["bg"], W),
                            jnp.tile(params["bb"], W)]).reshape(1, 2 * W * Co)
    return gk, bias.astype(jnp.float32)


def _pick_batch_block(B, H):
    """Largest divisor of B with bb*H roughly filling the MXU's M dimension."""
    target = max(1, 128 // max(H, 1))
    bb = 1
    for cand in range(1, min(B, target) + 1):
        if B % cand == 0:
            bb = cand
    return bb


# ---------------------------------------------------------------------------
# Forward pass.  Native layout is NHWC (no transposes on the hot path).
# ---------------------------------------------------------------------------
@functools.partial(jax.jit, static_argnames=("compute_dtype", "batch_block"))
def spatial_film_forward(x, cond, params, *, compute_dtype=jnp.bfloat16,
                         batch_block=None):
    """x: (B, H, W, Co) NHWC, cond: (B, Hc, Wc, Cc) NHWC -> (B, H, W, Co)."""
    B, H, W, Co = x.shape
    Bc, Hc, Wc, Cc = cond.shape
    assert Bc == B
    WCo, WcCc = W * Co, Wc * Cc
    # NOTE: for production shapes keep W*Co a multiple of 128 (pad channels if needed)
    # so the final store stays an unmasked dense vst.

    bb = batch_block if batch_block is not None else _pick_batch_block(B, H)
    assert B % bb == 0, "batch_block must divide B"

    # Lane-dense slabs: contiguous collapses of trailing dims -> free, no transpose.
    x2 = x.reshape(B, H, WCo)
    c2 = cond.reshape(B, Hc, WcCc)

    rha = _row_operator(H, Hc).astype(compute_dtype)              # (3H, Hc)
    gk, bias = _col_conv_operators(params, W, Wc)
    gk = gk.astype(compute_dtype)                                 # (3, Wc*Cc, 2*W*Co)

    esz = jnp.dtype(compute_dtype).itemsize
    flops = (2 * B * (3 * H) * Hc * WcCc                 # row resize matmuls
             + 2 * B * H * 3 * WcCc * (2 * WCo)          # conv / width matmuls
             + 2 * B * H * WCo)                          # FiLM
    bytes_accessed = (4 * (2 * B * H * WCo + B * Hc * WcCc + 2 * WCo)
                      + esz * (3 * H * Hc + 3 * WcCc * 2 * WCo))
    # Double-buffered per-block VMEM footprint (x, out, cond, rha, gk, bias).
    blk = (2 * (bb * H * WCo * 4) * 2
           + 2 * (bb * Hc * WcCc * 4)
           + 2 * (3 * H * Hc * esz)
           + 2 * (3 * WcCc * 2 * WCo * esz)
           + 2 * (2 * WCo * 4))
    vmem_limit = int(min(128 * 1024 * 1024,
                         max(32 * 1024 * 1024, 2 * blk + (2 << 20))))

    out2 = pl.pallas_call(
        _spatial_film_kernel,
        grid=(B // bb,),
        in_specs=[
            pl.BlockSpec((bb, H, WCo), lambda i: (i, 0, 0)),        # x (aliased to out)
            pl.BlockSpec((bb, Hc, WcCc), lambda i: (i, 0, 0)),      # cond
            pl.BlockSpec((3 * H, Hc), lambda i: (0, 0)),            # row operator (invariant)
            pl.BlockSpec((3, WcCc, 2 * WCo), lambda i: (0, 0, 0)),  # G_kh operators (invariant)
            pl.BlockSpec((1, 2 * WCo), lambda i: (0, 0)),           # bias (invariant)
        ],
        out_specs=pl.BlockSpec((bb, H, WCo), lambda i: (i, 0, 0)),
        out_shape=jax.ShapeDtypeStruct((B, H, WCo), x.dtype),
        # Free when x is a dead intermediate inside a larger jit (saves an HBM buffer).
        input_output_aliases={0: 0},
        compiler_params=pltpu.CompilerParams(
            dimension_semantics=("parallel",),      # batch tiles shard across TCs
            vmem_limit_bytes=vmem_limit),
        cost_estimate=pl.CostEstimate(flops=int(flops), transcendentals=0,
                                      bytes_accessed=int(bytes_accessed)),
    )(x2, c2, rha, gk, bias)

    return out2.reshape(B, H, W, Co)


def spatial_film_forward_nchw(x_nchw, cond_nchw, params, **kwargs):
    """Drop-in parity with the PyTorch NCHW module.  Prefer the NHWC entry point:
    these boundary transposes re-read/write x, cond and out through HBM."""
    x = jnp.transpose(x_nchw, (0, 2, 3, 1))
    c = jnp.transpose(cond_nchw, (0, 2, 3, 1))
    out = spatial_film_forward(x, c, params, **kwargs)
    return jnp.transpose(out, (0, 3, 1, 2))


# ---------------------------------------------------------------------------
# Pure-JAX reference (independent path: gather-based bilinear + lax.conv), NHWC.
# ---------------------------------------------------------------------------
def _bilinear_resize_ref(c, H, W):
    B, Hc, Wc, C = c.shape

    def idx(out_size, in_size):
        s = in_size / out_size
        src = (jnp.arange(out_size, dtype=jnp.float32) + 0.5) * s - 0.5
        src = jnp.maximum(src, 0.0)
        i0 = jnp.clip(jnp.floor(src), 0, in_size - 1).astype(jnp.int32)
        i1 = jnp.minimum(i0 + 1, in_size - 1)
        f = src - i0.astype(jnp.float32)
        return i0, i1, f

    h0, h1, fh = idx(H, Hc)
    w0, w1, fw = idx(W, Wc)
    ch = c[:, h0] * (1.0 - fh)[None, :, None, None] + c[:, h1] * fh[None, :, None, None]
    return (ch[:, :, w0] * (1.0 - fw)[None, None, :, None]
            + ch[:, :, w1] * fw[None, None, :, None])


def spatial_film_ref(x, cond, params):
    B, H, W, Co = x.shape
    cr = _bilinear_resize_ref(cond, H, W)
    wg = jnp.transpose(params["wg"], (2, 3, 1, 0))
    wb = jnp.transpose(params["wb"], (2, 3, 1, 0))
    gamma = lax.conv_general_dilated(
        cr, wg, (1, 1), ((1, 1), (1, 1)),
        dimension_numbers=("NHWC", "HWIO", "NHWC")) + params["bg"].reshape(1, 1, 1, -1)
    beta = lax.conv_general_dilated(
        cr, wb, (1, 1), ((1, 1), (1, 1)),
        dimension_numbers=("NHWC", "HWIO", "NHWC")) + params["bb"].reshape(1, 1, 1, -1)
    return gamma * x + beta


# ---------------------------------------------------------------------------
# Deterministic parameter init (PyTorch OIHW weight layout).
# ---------------------------------------------------------------------------
def init_params(key, cond_channels, out_channels):
    k1, k2, k3, k4 = jax.random.split(key, 4)
    scale = 0.1
    return dict(
        wg=(scale * jax.random.normal(k1, (out_channels, cond_channels, 3, 3))).astype(jnp.float32),
        bg=(scale * jax.random.normal(k2, (out_channels,))).astype(jnp.float32),
        wb=(scale * jax.random.normal(k3, (out_channels, cond_channels, 3, 3))).astype(jnp.float32),
        bb=(scale * jax.random.normal(k4, (out_channels,))).astype(jnp.float32),
    )


# ---------------------------------------------------------------------------
if __name__ == "__main__":
    key = jax.random.PRNGKey(0)

    # (name, B, Co, H, W, Cc, Hc, Wc) -- exercise both up- and down-sampling paths.
    cases = [
        ("upsample   cond  8x8  -> 16x16", 2, 8, 16, 16, 4, 8, 8),
        ("downsample cond 24x20 -> 16x16", 2, 8, 16, 16, 4, 24, 20),
    ]

    for idx, (name, B, Co, H, W, Cc, Hc, Wc) in enumerate(cases):
        kx, kc, kp = jax.random.split(jax.random.fold_in(key, idx), 3)
        x = jax.random.normal(kx, (B, H, W, Co), jnp.float32)       # NHWC native layout
        cond = jax.random.normal(kc, (B, Hc, Wc, Cc), jnp.float32)
        params = init_params(kp, Cc, Co)

        ref = jax.block_until_ready(spatial_film_ref(x, cond, params))

        # f32 MXU path: tight tolerance proves the fused math is exact.
        out32 = jax.block_until_ready(
            spatial_film_forward(x, cond, params, compute_dtype=jnp.float32))
        assert out32.shape == (B, H, W, Co), out32.shape
        if not bool(jnp.allclose(out32, ref, atol=5e-4, rtol=5e-4)):
            raise RuntimeError(
                f"[{name}] f32 mismatch, max|diff|={float(jnp.max(jnp.abs(out32 - ref)))}")

        # bf16 MXU path (default): operators + matmul operands bf16, f32 accumulation.
        out16 = jax.block_until_ready(spatial_film_forward(x, cond, params))
        if not bool(jnp.allclose(out16, ref, atol=8e-2, rtol=5e-2)):
            raise RuntimeError(
                f"[{name}] bf16 mismatch, max|diff|={float(jnp.max(jnp.abs(out16 - ref)))}")

    # NCHW drop-in parity with the PyTorch module layout (boundary transposes only).
    B, Co, H, W, Cc, Hc, Wc = 2, 8, 16, 16, 4, 8, 8
    kx, kc, kp = jax.random.split(key, 3)
    x_nchw = jax.random.normal(kx, (B, Co, H, W), jnp.float32)
    c_nchw = jax.random.normal(kc, (B, Cc, Hc, Wc), jnp.float32)
    params = init_params(kp, Cc, Co)
    out_nchw = jax.block_until_ready(
        spatial_film_forward_nchw(x_nchw, c_nchw, params, compute_dtype=jnp.float32))
    ref_nchw = jnp.transpose(
        spatial_film_ref(jnp.transpose(x_nchw, (0, 2, 3, 1)),
                         jnp.transpose(c_nchw, (0, 2, 3, 1)), params), (0, 3, 1, 2))
    if not bool(jnp.allclose(out_nchw, ref_nchw, atol=5e-4, rtol=5e-4)):
        raise RuntimeError("NCHW wrapper mismatch")

    print("KERNEL_OK")
</pallas_src>

<mosaic_0001>
module attributes {stable_mosaic.version = 11 : i64} {
  func.func private @main(%arg0: i32) attributes {dimension_semantics = [#tpu.dimension_semantics<core_parallel>], iteration_bounds = array<i64: 2>, tpu.core_type = #tpu.core_type<sc_scalar_subcore>, window_params = []} {
    return
  }
}

module attributes {stable_mosaic.version = 11 : i64} {
  func.func private @main(%arg0: i32) attributes {dimension_semantics = [#tpu.dimension_semantics<core_parallel>], iteration_bounds = array<i64: 2>, tpu.core_type = #tpu.core_type<sc_scalar_subcore>, window_params = []} {
    return
  }
}

module attributes {stable_mosaic.version = 11 : i64} {
  func.func @_spatial_film_kernel(%arg0: i32, %arg1: memref<2x16x128xf32, #tpu.memory_space<vmem>>, %arg2: memref<2x8x32xf32, #tpu.memory_space<vmem>>, %arg3: memref<48x8xf32, #tpu.memory_space<vmem>>, %arg4: memref<3x32x256xf32, #tpu.memory_space<vmem>>, %arg5: memref<1x256xf32, #tpu.memory_space<vmem>>, %arg6: memref<2x16x128xf32, #tpu.memory_space<vmem>>) attributes {dimension_semantics = [#tpu.dimension_semantics<parallel>], iteration_bounds = array<i64: 1>, scalar_prefetch = 0 : i64, scratch_operands = 0 : i64, tpu.core_type = #tpu.core_type<tc>, window_params = [{transform_indices = @transform_0, window_bounds = array<i64: 2, 16, 128>}, {transform_indices = @transform_1, window_bounds = array<i64: 2, 8, 32>}, {pipeline_mode = #tpu.pipeline_mode<synchronous>, transform_indices = @transform_2, window_bounds = array<i64: 48, 8>}, {pipeline_mode = #tpu.pipeline_mode<synchronous>, transform_indices = @transform_3, window_bounds = array<i64: 3, 32, 256>}, {pipeline_mode = #tpu.pipeline_mode<synchronous>, transform_indices = @transform_4, window_bounds = array<i64: 1, 256>}, {transform_indices = @transform_5, window_bounds = array<i64: 2, 16, 128>}]} {
    %c0 = arith.constant 0 : index
    %c0_0 = arith.constant 0 : index
    %0 = vector.load %arg3[%c0, %c0_0] : memref<48x8xf32, #tpu.memory_space<vmem>>, vector<48x8xf32>
    %c0_1 = arith.constant 0 : index
    %c0_2 = arith.constant 0 : index
    %c0_3 = arith.constant 0 : index
    %1 = vector.load %arg2[%c0_1, %c0_2, %c0_3] : memref<2x8x32xf32, #tpu.memory_space<vmem>>, vector<1x8x32xf32>
    %2 = vector.shape_cast %1 : vector<1x8x32xf32> to vector<8x32xf32>
    %cst = arith.constant dense<0.000000e+00> : vector<48x32xf32>
    %3 = tpu.matmul %0, %2, %cst {dimension_numbers = #tpu.dot_dimension_numbers<[1], [0], [0], [1], [0, 0, 1, 1], [], []>} : vector<48x8xf32>, vector<8x32xf32>, vector<48x32xf32> -> vector<48x32xf32>
    %c0_4 = arith.constant 0 : index
    %c0_5 = arith.constant 0 : index
    %4 = vector.load %arg3[%c0_4, %c0_5] : memref<48x8xf32, #tpu.memory_space<vmem>>, vector<48x8xf32>
    %c1 = arith.constant 1 : index
    %c0_6 = arith.constant 0 : index
    %c0_7 = arith.constant 0 : index
    %5 = vector.load %arg2[%c1, %c0_6, %c0_7] : memref<2x8x32xf32, #tpu.memory_space<vmem>>, vector<1x8x32xf32>
    %6 = vector.shape_cast %5 : vector<1x8x32xf32> to vector<8x32xf32>
    %cst_8 = arith.constant dense<0.000000e+00> : vector<48x32xf32>
    %7 = tpu.matmul %4, %6, %cst_8 {dimension_numbers = #tpu.dot_dimension_numbers<[1], [0], [0], [1], [0, 0, 1, 1], [], []>} : vector<48x8xf32>, vector<8x32xf32>, vector<48x32xf32> -> vector<48x32xf32>
    %8 = vector.extract_strided_slice %3 {offsets = [0, 0], sizes = [16, 32], strides = [1, 1]} : vector<48x32xf32> to vector<16x32xf32>
    %9 = vector.extract_strided_slice %7 {offsets = [0, 0], sizes = [16, 32], strides = [1, 1]} : vector<48x32xf32> to vector<16x32xf32>
    %10 = tpu.concatenate %8, %9 in 0 : vector<16x32xf32>, vector<16x32xf32> -> vector<32x32xf32>
    %c0_9 = arith.constant 0 : index
    %c0_10 = arith.constant 0 : index
    %c0_11 = arith.constant 0 : index
    %11 = vector.load %arg4[%c0_9, %c0_10, %c0_11] : memref<3x32x256xf32, #tpu.memory_space<vmem>>, vector<1x32x256xf32>
    %12 = vector.shape_cast %11 : vector<1x32x256xf32> to vector<32x256xf32>
    %cst_12 = arith.constant dense<0.000000e+00> : vector<32x256xf32>
    %13 = tpu.matmul %10, %12, %cst_12 {dimension_numbers = #tpu.dot_dimension_numbers<[1], [0], [0], [1], [0, 0, 1, 1], [], []>} : vector<32x32xf32>, vector<32x256xf32>, vector<32x256xf32> -> vector<32x256xf32>
    %14 = vector.extract_strided_slice %3 {offsets = [16, 0], sizes = [16, 32], strides = [1, 1]} : vector<48x32xf32> to vector<16x32xf32>
    %15 = vector.extract_strided_slice %7 {offsets = [16, 0], sizes = [16, 32], strides = [1, 1]} : vector<48x32xf32> to vector<16x32xf32>
    %16 = tpu.concatenate %14, %15 in 0 : vector<16x32xf32>, vector<16x32xf32> -> vector<32x32xf32>
    %c1_13 = arith.constant 1 : index
    %c0_14 = arith.constant 0 : index
    %c0_15 = arith.constant 0 : index
    %17 = vector.load %arg4[%c1_13, %c0_14, %c0_15] : memref<3x32x256xf32, #tpu.memory_space<vmem>>, vector<1x32x256xf32>
    %18 = vector.shape_cast %17 : vector<1x32x256xf32> to vector<32x256xf32>
    %cst_16 = arith.constant dense<0.000000e+00> : vector<32x256xf32>
    %19 = tpu.matmul %16, %18, %cst_16 {dimension_numbers = #tpu.dot_dimension_numbers<[1], [0], [0], [1], [0, 0, 1, 1], [], []>} : vector<32x32xf32>, vector<32x256xf32>, vector<32x256xf32> -> vector<32x256xf32>
    %20 = arith.addf %13, %19 : vector<32x256xf32>
    %21 = vector.extract_strided_slice %3 {offsets = [32, 0], sizes = [16, 32], strides = [1, 1]} : vector<48x32xf32> to vector<16x32xf32>
    %22 = vector.extract_strided_slice %7 {offsets = [32, 0], sizes = [16, 32], strides = [1, 1]} : vector<48x32xf32> to vector<16x32xf32>
    %23 = tpu.concatenate %21, %22 in 0 : vector<16x32xf32>, vector<16x32xf32> -> vector<32x32xf32>
    %c2 = arith.constant 2 : index
    %c0_17 = arith.constant 0 : index
    %c0_18 = arith.constant 0 : index
    %24 = vector.load %arg4[%c2, %c0_17, %c0_18] : memref<3x32x256xf32, #tpu.memory_space<vmem>>, vector<1x32x256xf32>
    %25 = vector.shape_cast %24 : vector<1x32x256xf32> to vector<32x256xf32>
    %cst_19 = arith.constant dense<0.000000e+00> : vector<32x256xf32>
    %26 = tpu.matmul %23, %25, %cst_19 {dimension_numbers = #tpu.dot_dimension_numbers<[1], [0], [0], [1], [0, 0, 1, 1], [], []>} : vector<32x32xf32>, vector<32x256xf32>, vector<32x256xf32> -> vector<32x256xf32>
    %27 = arith.addf %20, %26 : vector<32x256xf32>
    %c0_20 = arith.constant 0 : index
    %c0_21 = arith.constant 0 : index
    %28 = vector.load %arg5[%c0_20, %c0_21] : memref<1x256xf32, #tpu.memory_space<vmem>>, vector<1x256xf32>
    %29 = vector.broadcast %28 : vector<1x256xf32> to vector<32x256xf32>
    %30 = arith.addf %27, %29 : vector<32x256xf32>
    %c0_22 = arith.constant 0 : index
    %c0_23 = arith.constant 0 : index
    %c0_24 = arith.constant 0 : index
    %31 = vector.load %arg1[%c0_22, %c0_23, %c0_24] : memref<2x16x128xf32, #tpu.memory_space<vmem>>, vector<2x16x128xf32>
    %32 = vector.shape_cast %31 : vector<2x16x128xf32> to vector<32x128xf32>
    %33 = vector.extract_strided_slice %30 {offsets = [0, 0], sizes = [32, 128], strides = [1, 1]} : vector<32x256xf32> to vector<32x128xf32>
    %34 = arith.mulf %33, %32 : vector<32x128xf32>
    %35 = vector.extract_strided_slice %30 {offsets = [0, 128], sizes = [32, 128], strides = [1, 1]} : vector<32x256xf32> to vector<32x128xf32>
    %36 = arith.addf %34, %35 : vector<32x128xf32>
    %37 = vector.shape_cast %36 : vector<32x128xf32> to vector<2x16x128xf32>
    %c0_25 = arith.constant 0 : index
    %c0_26 = arith.constant 0 : index
    %c0_27 = arith.constant 0 : index
    %38 = vector.load %arg6[%c0_25, %c0_26, %c0_27] : memref<2x16x128xf32, #tpu.memory_space<vmem>>, vector<2x16x128xf32>
    tpu.vector_store %arg6[%c0_25, %c0_26, %c0_27], %37 {strides = array<i32>} : memref<2x16x128xf32, #tpu.memory_space<vmem>>, vector<2x16x128xf32>,
    return
  }
  func.func @transform_0(%arg0: i32) -> (i32, i32, i32) {
    %c0_i32 = arith.constant 0 : i32
    %c0_i32_0 = arith.constant 0 : i32
    %c0_i32_1 = arith.constant 0 : i32
    return %arg0, %c0_i32, %c0_i32_0 : i32, i32, i32
  }
  func.func @transform_1(%arg0: i32) -> (i32, i32, i32) {
    %c0_i32 = arith.constant 0 : i32
    %c0_i32_0 = arith.constant 0 : i32
    %c0_i32_1 = arith.constant 0 : i32
    return %arg0, %c0_i32, %c0_i32_0 : i32, i32, i32
  }
  func.func @transform_2(%arg0: i32) -> (i32, i32) {
    %c0_i32 = arith.constant 0 : i32
    %c0_i32_0 = arith.constant 0 : i32
    %c0_i32_1 = arith.constant 0 : i32
    return %c0_i32, %c0_i32_0 : i32, i32
  }
  func.func @transform_3(%arg0: i32) -> (i32, i32, i32) {
    %c0_i32 = arith.constant 0 : i32
    %c0_i32_0 = arith.constant 0 : i32
    %c0_i32_1 = arith.constant 0 : i32
    %c0_i32_2 = arith.constant 0 : i32
    return %c0_i32, %c0_i32_0, %c0_i32_1 : i32, i32, i32
  }
  func.func @transform_4(%arg0: i32) -> (i32, i32) {
    %c0_i32 = arith.constant 0 : i32
    %c0_i32_0 = arith.constant 0 : i32
    %c0_i32_1 = arith.constant 0 : i32
    return %c0_i32, %c0_i32_0 : i32, i32
  }
  func.func @transform_5(%arg0: i32) -> (i32, i32, i32) {
    %c0_i32 = arith.constant 0 : i32
    %c0_i32_0 = arith.constant 0 : i32
    %c0_i32_1 = arith.constant 0 : i32
    return %arg0, %c0_i32, %c0_i32_0 : i32, i32, i32
  }
}

</mosaic_0001>

<llo_original>
// kernel: tile.19
$region0: #{tile.19}
  %s0 = inlined_call_operand.vmem [shape: f32[16,8], index: 0, kind: input, shape index: {}]
  %s1 = inlined_call_operand.vmem [shape: f32[128], index: 1, kind: output, shape index: {}]
  $region1: #{tile.19} parent=0
    #allocation0 [shape = 'u8[4096]{0}', space=vmem, size = 0x1000, scoped, tag = 'scoped mem for output reshape']
    %v2 = vld [vmem:[%s0] sm:$0x1]
    %vm3 = vcmask 64512
    %4 = vst.msk [vmem:[#allocation0] sm:$0x1] %vm3, %v2
    %s5 = scalar_lea.vmem %s0, 15
    %v6 = vld [vmem:[%s5] sm:$0x1]
    %7 = vrot.lane.b32.xlu0 %v6, 120
    %v8 = vpop.permute.xlu0 %7
    %vm9 = vcmask 1048512
    %10 = vst.msk [vmem:[#allocation0] sm:$0x1] %vm9, %v8
    %s11 = scalar_lea.vmem %s0, 14
    %v12 = vld [vmem:[%s11] sm:$0x1]
    %13 = vrot.lane.b32.xlu0 %v12, 112
    %v14 = vpop.permute.xlu0 %13
    %vm15 = vcmask 982912
    %16 = vst.msk [vmem:[#allocation0] sm:$0x1] %vm15, %v14
    %s17 = scalar_lea.vmem %s0, 13
    %v18 = vld [vmem:[%s17] sm:$0x1]
    %19 = vrot.lane.b32.xlu0 %v18, 104
    %v20 = vpop.permute.xlu0 %19
    %vm21 = vcmask 917312
    %22 = vst.msk [vmem:[#allocation0] sm:$0x1] %vm21, %v20
    %s23 = scalar_lea.vmem %s0, 12
    %v24 = vld [vmem:[%s23] sm:$0x1]
    %25 = vrot.lane.b32.xlu0 %v24, 96
    %v26 = vpop.permute.xlu0 %25
    %vm27 = vcmask 851712
    %28 = vst.msk [vmem:[#allocation0] sm:$0x1] %vm27, %v26
    %s29 = scalar_lea.vmem %s0, 11
    %v30 = vld [vmem:[%s29] sm:$0x1]
    %31 = vrot.lane.b32.xlu0 %v30, 88
    %v32 = vpop.permute.xlu0 %31
    %vm33 = vcmask 786112
    %34 = vst.msk [vmem:[#allocation0] sm:$0x1] %vm33, %v32
    %s35 = scalar_lea.vmem %s0, 10
    %v36 = vld [vmem:[%s35] sm:$0x1]
    %37 = vrot.lane.b32.xlu0 %v36, 80
    %v38 = vpop.permute.xlu0 %37
    %vm39 = vcmask 720512
    %40 = vst.msk [vmem:[#allocation0] sm:$0x1] %vm39, %v38
    %s41 = scalar_lea.vmem %s0, 9
    %v42 = vld [vmem:[%s41] sm:$0x1]
    %43 = vrot.lane.b32.xlu0 %v42, 72
    %v44 = vpop.permute.xlu0 %43
    %vm45 = vcmask 654912
    %46 = vst.msk [vmem:[#allocation0] sm:$0x1] %vm45, %v44
    %s47 = scalar_lea.vmem %s0, 8
    %v48 = vld [vmem:[%s47] sm:$0x1]
    %49 = vrot.lane.b32.xlu0 %v48, 64
    %v50 = vpop.permute.xlu0 %49
    %vm51 = vcmask 589312
    %52 = vst.msk [vmem:[#allocation0] sm:$0x1] %vm51, %v50
    %s53 = scalar_lea.vmem %s0, 7
    %v54 = vld [vmem:[%s53] sm:$0x1]
    %55 = vrot.lane.b32.xlu0 %v54, 56
    %v56 = vpop.permute.xlu0 %55
    %vm57 = vcmask 523712
    %58 = vst.msk [vmem:[#allocation0] sm:$0x1] %vm57, %v56
    %s59 = scalar_lea.vmem %s0, 6
    %v60 = vld [vmem:[%s59] sm:$0x1]
    %61 = vrot.lane.b32.xlu0 %v60, 48
    %v62 = vpop.permute.xlu0 %61
    %vm63 = vcmask 458112
    %64 = vst.msk [vmem:[#allocation0] sm:$0x1] %vm63, %v62
    %s65 = scalar_lea.vmem %s0, 5
    %v66 = vld [vmem:[%s65] sm:$0x1]
    %67 = vrot.lane.b32.xlu0 %v66, 40
    %v68 = vpop.permute.xlu0 %67
    %vm69 = vcmask 392512
    %70 = vst.msk [vmem:[#allocation0] sm:$0x1] %vm69, %v68
    %s71 = scalar_lea.vmem %s0, 4
    %v72 = vld [vmem:[%s71] sm:$0x1]
    %73 = vrot.lane.b32.xlu0 %v72, 32
    %v74 = vpop.permute.xlu0 %73
    %vm75 = vcmask 326912
    %76 = vst.msk [vmem:[#allocation0] sm:$0x1] %vm75, %v74
    %s77 = scalar_lea.vmem %s0, 3
    %v78 = vld [vmem:[%s77] sm:$0x1]
    %79 = vrot.lane.b32.xlu0 %v78, 24
    %v80 = vpop.permute.xlu0 %79
    %vm81 = vcmask 261312
    %82 = vst.msk [vmem:[#allocation0] sm:$0x1] %vm81, %v80
    %s83 = scalar_lea.vmem %s0, 2
    %v84 = vld [vmem:[%s83] sm:$0x1]
    %85 = vrot.lane.b32.xlu0 %v84, 16
    %v86 = vpop.permute.xlu0 %85
    %vm87 = vcmask 195712
    %88 = vst.msk [vmem:[#allocation0] sm:$0x1] %vm87, %v86
    %s89 = scalar_lea.vmem %s0, 1
    %v90 = vld [vmem:[%s89] sm:$0x1]
    %91 = vrot.lane.b32.xlu0 %v90, 8
    %v92 = vpop.permute.xlu0 %91
    %vm93 = vcmask 130112
    %94 = vst.msk [vmem:[#allocation0] sm:$0x1] %vm93, %v92
    %s96 = sshll.u32 1, 1
    %s97 = ssub.s32 %s96, 1
    %v99 = vld [vmem:[#allocation0] sm:%s97]
    %s100 = sshll.u32 1, 1
    %s101 = ssub.s32 %s100, 1
    %102 = vst [vmem:[%s1] sm:%s101] %v99

// kernel: tile.18
$region0: #{tile.18}
  #allocation2 [shape = 's32[1]{0}', space=sflag, size = 0x4, scoped, tag = 'scoped memory for tile.18']
  %s0 = inlined_call_operand.hbm [shape: f32[8], index: 0, kind: input, shape index: {}]
  %s1 = inlined_call_operand.vmem [shape: f32[16,8], index: 1, kind: output, shape index: {}]
  $region1: #{tile.18} parent=0
    #allocation0 [shape = 'u8[512]{0}', space=vmem, size = 0x400, scoped, tag = 'operand span for operand 0']
    #allocation1 [shape = 's32[1]{0}', space=sflag, size = 0x4, scoped, tag = 'scoped memory for tile.18']
    %2 = vsyncpa [#allocation1], 0
    // Predicated region
    $region2: #{tile.18} parent=1 // pred_check
      _
    $region3: #{tile.18} parent=1 // pred_check_branch
      %4 = sbr.rel (0) target = $region5
    $region4: #{tile.18} parent=1 // pred_region
      %s6 = ssub.s32 16, 16
      %7 = vsyncadd [#allocation1], %s6
      %s9 = sshll.u32 [#allocation0], 4
      %s10 = int_to_ptr.vmem [resolvable:$true] %s9
      %12 = dma.hbm_to_vmem [thread:$0]  %s0, 16, %s10, [#allocation1]
    $region5: #{tile.18} parent=1 // pred_fallthru
      _
    // Predicated region
    $region6: #{tile.18} parent=1 // pred_check
      _
    $region7: #{tile.18} parent=1 // pred_check_branch
      %14 = sbr.rel (0) target = $region9
    $region8: #{tile.18} parent=1 // pred_region
      %15 = dma.done [#allocation1], 16
    $region9: #{tile.18} parent=1 // pred_fallthru
      _
    %v16 = vld [vmem:[#allocation0] ss:$0 sm:$0xff]
    %17 = vst [vmem:[%s1] sm:$0xff] %v16
    %s18 = scalar_lea.vmem %s1, 8
    %19 = vst [vmem:[%s18] sm:$0xff] %v16
    %20 = vsyncpa [#allocation1], 1

// kernel: spatial_film_forward.1
$region0: #{spatial_film_forward.1}
  #allocation0 [shape = 'u32[]', space=smem, size = 0x4, offset = 0x4, fixed_abs, tag = 'smem constant byte address 0x4 - core index']
  #allocation1 [shape = 'u32[144,128]{1,0:T(1,128)}', space=vmem, size = 0x12000, scoped, tag = 'internal scratch']
  %s0 = inlined_call_operand.vmem [shape: f32[2,16,128], index: 0, kind: input, shape index: {}, may-alias: {0,5}]
  %s1 = inlined_call_operand.vmem [shape: f32[2,8,32], index: 1, kind: input, shape index: {}]
  %s2 = inlined_call_operand.vmem [shape: f32[48,8], index: 2, kind: input, shape index: {}]
  %s3 = inlined_call_operand.vmem [shape: f32[3,32,256], index: 3, kind: input, shape index: {}]
  %s4 = inlined_call_operand.vmem [shape: f32[1,256], index: 4, kind: input, shape index: {}]
  %s5 = inlined_call_operand.vmem [shape: f32[2,16,128], index: 5, kind: output, shape index: {}, may-alias: {0,5}]
  %s6 = sld [smem:[#allocation0]]
  $region30: #{spatial_film_forward.1} parent=0
    _
  %s8 = ssub.s32 1, %s6
  %s9 = scalar_select 0, %s8, %s6
  // Predicated region
  $region2: #{spatial_film_forward.1} parent=0 // pred_check
    _
  $region3: #{spatial_film_forward.1} parent=0 // pred_check_branch
    %11 = sbr.rel (0) target = $region5
  $region4: #{spatial_film_forward.1} parent=0 // pred_region
    _
  $region5: #{spatial_film_forward.1} parent=0 // pred_fallthru
    _
  // Predicated region
  $region6: #{spatial_film_forward.1} parent=0 // pred_check
    _
  $region7: #{spatial_film_forward.1} parent=0 // pred_check_branch
    %13 = sbr.rel (0) target = $region9
  $region8: #{spatial_film_forward.1} parent=0 // pred_region
    _
  $region9: #{spatial_film_forward.1} parent=0 // pred_fallthru
    _
  // Predicated region
  $region10: #{spatial_film_forward.1} parent=0 // pred_check
    _
  $region11: #{spatial_film_forward.1} parent=0 // pred_check_branch
    %15 = sbr.rel (0) target = $region13
  $region12: #{spatial_film_forward.1} parent=0 // pred_region
    _
  $region13: #{spatial_film_forward.1} parent=0 // pred_fallthru
    _
  // Predicated region
  $region14: #{spatial_film_forward.1} parent=0 // pred_check
    _
  $region15: #{spatial_film_forward.1} parent=0 // pred_check_branch
    %17 = sbr.rel (0) target = $region17
  $region16: #{spatial_film_forward.1} parent=0 // pred_region
    _
  $region17: #{spatial_film_forward.1} parent=0 // pred_fallthru
    _
  // Predicated region
  $region18: #{spatial_film_forward.1} parent=0 // pred_check
    _
  $region19: #{spatial_film_forward.1} parent=0 // pred_check_branch
    %19 = sbr.rel (0) target = $region21
  $region20: #{spatial_film_forward.1} parent=0 // pred_region
    _
  $region21: #{spatial_film_forward.1} parent=0 // pred_fallthru
    _
  %v20 = vld [vmem:[%s2] sm:$0xff]
  %v21 = vld [vmem:[%s2 + $0x8] sm:$0xff]
  %v22 = vld [vmem:[%s2 + $0x10] sm:$0xff]
  %v23 = vld [vmem:[%s2 + $0x18] sm:$0xff]
  %v24 = vld [vmem:[%s2 + $0x20] sm:$0xff]
  %v25 = vld [vmem:[%s2 + $0x28] sm:$0xff]
  %v26 = vld [vmem:[%s1] sm:$0xff]
  %vm27 = vcmask 64512
  %v29 = vsel %vm27, %v20, 0
  %v32 = vsel %vm27, %v21, 0
  %v35 = vsel %vm27, %v22, 0
  %v38 = vsel %vm27, %v23, 0
  %v41 = vsel %vm27, %v24, 0
  %v44 = vsel %vm27, %v25, 0
  %46 = vmatprep.subr.mxu0 0.0
  %47 = vmatpush1.msra.mxu0 0.0
  %48 = vmatprep.subr.mxu0 0.0
  %49 = vmatpush1.msra.mxu0 0.0
  %50 = vmatprep.subr.mxu0 0.0
  %51 = vmatpush1.msra.mxu0 0.0
  %52 = vmatprep.subr.mxu0 0.0
  %53 = vmatpush1.msra.mxu0 0.0
  %54 = vmatprep.subr.mxu0 0.0
  %55 = vmatpush1.msra.mxu0 0.0
  %56 = vmatprep.subr.mxu0 0.0
  %57 = vmatpush1.msra.mxu0 0.0
  %58 = vmatprep.subr.mxu0 0.0
  %59 = vmatpush1.msra.mxu0 0.0
  %60 = vmatprep.subr.mxu0 0.0
  %61 = vmatpush1.msra.mxu0 0.0
  %62 = vmatprep.subr.mxu0 0.0
  %63 = vmatpush1.msra.mxu0 0.0
  %64 = vmatprep.subr.mxu0 0.0
  %65 = vmatpush1.msra.mxu0 0.0
  %66 = vmatprep.subr.mxu0 0.0
  %67 = vmatpush1.msra.mxu0 0.0
  %68 = vmatprep.subr.mxu0 0.0
  %69 = vmatpush1.msra.mxu0 0.0
  %70 = vmatprep.subr.mxu0 0.0
  %71 = vmatpush1.msra.mxu0 0.0
  %72 = vmatprep.subr.mxu0 0.0
  %73 = vmatpush1.msra.mxu0 0.0
  %74 = vmatprep.subr.mxu0 0.0
  %75 = vmatpush1.msra.mxu0 0.0
  %76 = vmatprep.subr.mxu0 0.0
  %77 = vmatpush1.msra.mxu0 %v26
  %78 = vmatprep.subr.mxu0 0.0
  %79 = vmatpush2.msra.mxu0 0.0
  %80 = vmatprep.subr.mxu0 0.0
  %81 = vmatpush2.msra.mxu0 0.0
  %82 = vmatprep.subr.mxu0 0.0
  %83 = vmatpush2.msra.mxu0 0.0
  %84 = vmatprep.subr.mxu0 0.0
  %85 = vmatpush2.msra.mxu0 0.0
  %86 = vmatprep.subr.mxu0 0.0
  %87 = vmatpush2.msra.mxu0 0.0
  %88 = vmatprep.subr.mxu0 0.0
  %89 = vmatpush2.msra.mxu0 0.0
  %90 = vmatprep.subr.mxu0 0.0
  %91 = vmatpush2.msra.mxu0 0.0
  %92 = vmatprep.subr.mxu0 0.0
  %93 = vmatpush2.msra.mxu0 0.0
  %94 = vmatprep.subr.mxu0 0.0
  %95 = vmatpush2.msra.mxu0 0.0
  %96 = vmatprep.subr.mxu0 0.0
  %97 = vmatpush2.msra.mxu0 0.0
  %98 = vmatprep.subr.mxu0 0.0
  %99 = vmatpush2.msra.mxu0 0.0
  %100 = vmatprep.subr.mxu0 0.0
  %101 = vmatpush2.msra.mxu0 0.0
  %102 = vmatprep.subr.mxu0 0.0
  %103 = vmatpush2.msra.mxu0 0.0
  %104 = vmatprep.subr.mxu0 0.0
  %105 = vmatpush2.msra.mxu0 0.0
  %106 = vmatprep.subr.mxu0 0.0
  %107 = vmatpush2.msra.mxu0 0.0
  %108 = vmatprep.subr.mxu0 0.0
  %109 = vmatpush2.msra.mxu0 0.0
  %110 = vmatprep.mubr.f32.mxu0 0.0
  %111 = vmatmul.mubr.f32.gmra.mxu0 %v29
  %v112 = vpop.f32.mrf.mxu0
  %v113 = vadd.f32 0.0, %v112
  %v114 = vpop.f32.mrf.mxu0
  %115 = vmatprep.mubr.f32.mxu0 0.0
  %116 = vmatmul.mubr.f32.gmra.mxu0 %v32
  %v117 = vpop.f32.mrf.mxu0
  %v118 = vadd.f32 0.0, %v117
  %v119 = vpop.f32.mrf.mxu0
  %120 = vmatprep.mubr.f32.mxu0 0.0
  %121 = vmatmul.mubr.f32.gmra.mxu0 %v35
  %v122 = vpop.f32.mrf.mxu0
  %v123 = vadd.f32 0.0, %v122
  %v124 = vpop.f32.mrf.mxu0
  %125 = vmatprep.mubr.f32.mxu0 0.0
  %126 = vmatmul.mubr.f32.gmra.mxu0 %v38
  %v127 = vpop.f32.mrf.mxu0
  %v128 = vadd.f32 0.0, %v127
  %v129 = vpop.f32.mrf.mxu0
  %130 = vmatprep.mubr.f32.mxu0 0.0
  %131 = vmatmul.mubr.f32.gmra.mxu0 %v41
  %v132 = vpop.f32.mrf.mxu0
  %v133 = vadd.f32 0.0, %v132
  %v134 = vpop.f32.mrf.mxu0
  %135 = vmatprep.mubr.f32.mxu0 0.0
  %136 = vmatmul.mubr.f32.gmra.mxu0 %v44
  %v137 = vpop.f32.mrf.mxu0
  %v138 = vadd.f32 0.0, %v137
  %v139 = vpop.f32.mrf.mxu0
  %140 = vdwg.mxu0
  %s141 = scalar_lea.vmem %s1, 8
  %v142 = vld [vmem:[%s141] sm:$0xff]
  %143 = vmatprep.subr.mxu0 0.0
  %144 = vmatpush1.msra.mxu0 0.0
  %145 = vmatprep.subr.mxu0 0.0
  %146 = vmatpush1.msra.mxu0 0.0
  %147 = vmatprep.subr.mxu0 0.0
  %148 = vmatpush1.msra.mxu0 0.0
  %149 = vmatprep.subr.mxu0 0.0
  %150 = vmatpush1.msra.mxu0 0.0
  %151 = vmatprep.subr.mxu0 0.0
  %152 = vmatpush1.msra.mxu0 0.0
  %153 = vmatprep.subr.mxu0 0.0
  %154 = vmatpush1.msra.mxu0 0.0
  %155 = vmatprep.subr.mxu0 0.0
  %156 = vmatpush1.msra.mxu0 0.0
  %157 = vmatprep.subr.mxu0 0.0
  %158 = vmatpush1.msra.mxu0 0.0
  %159 = vmatprep.subr.mxu0 0.0
  %160 = vmatpush1.msra.mxu0 0.0
  %161 = vmatprep.subr.mxu0 0.0
  %162 = vmatpush1.msra.mxu0 0.0
  %163 = vmatprep.subr.mxu0 0.0
  %164 = vmatpush1.msra.mxu0 0.0
  %165 = vmatprep.subr.mxu0 0.0
  %166 = vmatpush1.msra.mxu0 0.0
  %167 = vmatprep.subr.mxu0 0.0
  %168 = vmatpush1.msra.mxu0 0.0
  %169 = vmatprep.subr.mxu0 0.0
  %170 = vmatpush1.msra.mxu0 0.0
  %171 = vmatprep.subr.mxu0 0.0
  %172 = vmatpush1.msra.mxu0 0.0
  %173 = vmatprep.subr.mxu0 0.0
  %174 = vmatpush1.msra.mxu0 %v142
  %175 = vmatprep.subr.mxu0 0.0
  %176 = vmatpush2.msra.mxu0 0.0
  %177 = vmatprep.subr.mxu0 0.0
  %178 = vmatpush2.msra.mxu0 0.0
  %179 = vmatprep.subr.mxu0 0.0
  %180 = vmatpush2.msra.mxu0 0.0
  %181 = vmatprep.subr.mxu0 0.0
  %182 = vmatpush2.msra.mxu0 0.0
  %183 = vmatprep.subr.mxu0 0.0
  %184 = vmatpush2.msra.mxu0 0.0
  %185 = vmatprep.subr.mxu0 0.0
  %186 = vmatpush2.msra.mxu0 0.0
  %187 = vmatprep.subr.mxu0 0.0
  %188 = vmatpush2.msra.mxu0 0.0
  %189 = vmatprep.subr.mxu0 0.0
  %190 = vmatpush2.msra.mxu0 0.0
  %191 = vmatprep.subr.mxu0 0.0
  %192 = vmatpush2.msra.mxu0 0.0
  %193 = vmatprep.subr.mxu0 0.0
  %194 = vmatpush2.msra.mxu0 0.0
  %195 = vmatprep.subr.mxu0 0.0
  %196 = vmatpush2.msra.mxu0 0.0
  %197 = vmatprep.subr.mxu0 0.0
  %198 = vmatpush2.msra.mxu0 0.0
  %199 = vmatprep.subr.mxu0 0.0
  %200 = vmatpush2.msra.mxu0 0.0
  %201 = vmatprep.subr.mxu0 0.0
  %202 = vmatpush2.msra.mxu0 0.0
  %203 = vmatprep.subr.mxu0 0.0
  %204 = vmatpush2.msra.mxu0 0.0
  %205 = vmatprep.subr.mxu0 0.0
  %206 = vmatpush2.msra.mxu0 0.0
  %207 = vmatprep.mubr.f32.mxu0 0.0
  %208 = vmatmul.mubr.f32.gmra.mxu0 %v29
  %v209 = vpop.f32.mrf.mxu0
  %v210 = vadd.f32 0.0, %v209
  %v211 = vpop.f32.mrf.mxu0
  %212 = vmatprep.mubr.f32.mxu0 0.0
  %213 = vmatmul.mubr.f32.gmra.mxu0 %v32
  %v214 = vpop.f32.mrf.mxu0
  %v215 = vadd.f32 0.0, %v214
  %v216 = vpop.f32.mrf.mxu0
  %217 = vmatprep.mubr.f32.mxu0 0.0
  %218 = vmatmul.mubr.f32.gmra.mxu0 %v35
  %v219 = vpop.f32.mrf.mxu0
  %v220 = vadd.f32 0.0, %v219
  %v221 = vpop.f32.mrf.mxu0
  %222 = vmatprep.mubr.f32.mxu0 0.0
  %223 = vmatmul.mubr.f32.gmra.mxu0 %v38
  %v224 = vpop.f32.mrf.mxu0
  %v225 = vadd.f32 0.0, %v224
  %v226 = vpop.f32.mrf.mxu0
  %227 = vmatprep.mubr.f32.mxu0 0.0
  %228 = vmatmul.mubr.f32.gmra.mxu0 %v41
  %v229 = vpop.f32.mrf.mxu0
  %v230 = vadd.f32 0.0, %v229
  %v231 = vpop.f32.mrf.mxu0
  %232 = vmatprep.mubr.f32.mxu0 0.0
  %233 = vmatmul.mubr.f32.gmra.mxu0 %v44
  %v234 = vpop.f32.mrf.mxu0
  %v235 = vadd.f32 0.0, %v234
  %v236 = vpop.f32.mrf.mxu0
  %237 = vdwg.mxu0
  %v238 = vld [vmem:[%s3] sm:$0xff]
  %v239 = vld [vmem:[%s3 + $0x8] sm:$0xff]
  %v240 = vld [vmem:[%s3 + $0x10] sm:$0xff]
  %v241 = vld [vmem:[%s3 + $0x18] sm:$0xff]
  %v242 = vld [vmem:[%s3 + $0x20] sm:$0xff]
  %v243 = vld [vmem:[%s3 + $0x28] sm:$0xff]
  %v244 = vld [vmem:[%s3 + $0x30] sm:$0xff]
  %v245 = vld [vmem:[%s3 + $0x38] sm:$0xff]
  %s246 = scalar_lea.vmem %s3, 64
  %v247 = vld [vmem:[%s246] sm:$0xff]
  %v248 = vld [vmem:[%s246 + $0x8] sm:$0xff]
  %v249 = vld [vmem:[%s246 + $0x10] sm:$0xff]
  %v250 = vld [vmem:[%s246 + $0x18] sm:$0xff]
  %v251 = vld [vmem:[%s246 + $0x20] sm:$0xff]
  %v252 = vld [vmem:[%s246 + $0x28] sm:$0xff]
  %v253 = vld [vmem:[%s246 + $0x30] sm:$0xff]
  %v254 = vld [vmem:[%s246 + $0x38] sm:$0xff]
  %vm255 = vcmask 261120
  %v257 = vsel %vm255, %v123, 0
  %v260 = vsel %vm255, %v128, 0
  %v263 = vsel %vm255, %v220, 0
  %v266 = vsel %vm255, %v225, 0
  %268 = vmatprep.subr.mxu0 0.0
  %269 = vmatpush1.msra.mxu0 0.0
  %270 = vmatprep.subr.mxu0 0.0
  %271 = vmatpush1.msra.mxu0 0.0
  %272 = vmatprep.subr.mxu0 0.0
  %273 = vmatpush1.msra.mxu0 0.0
  %274 = vmatprep.subr.mxu0 0.0
  %275 = vmatpush1.msra.mxu0 0.0
  %276 = vmatprep.subr.mxu0 0.0
  %277 = vmatpush1.msra.mxu0 0.0
  %278 = vmatprep.subr.mxu0 0.0
  %279 = vmatpush1.msra.mxu0 0.0
  %280 = vmatprep.subr.mxu0 0.0
  %281 = vmatpush1.msra.mxu0 0.0
  %282 = vmatprep.subr.mxu0 0.0
  %283 = vmatpush1.msra.mxu0 0.0
  %284 = vmatprep.subr.mxu0 0.0
  %285 = vmatpush1.msra.mxu0 0.0
  %286 = vmatprep.subr.mxu0 0.0
  %287 = vmatpush1.msra.mxu0 0.0
  %288 = vmatprep.subr.mxu0 0.0
  %289 = vmatpush1.msra.mxu0 0.0
  %290 = vmatprep.subr.mxu0 0.0
  %291 = vmatpush1.msra.mxu0 0.0
  %292 = vmatprep.subr.mxu0 %v254
  %293 = vmatpush1.msra.mxu0 %v253
  %294 = vmatprep.subr.mxu0 %v252
  %295 = vmatpush1.msra.mxu0 %v251
  %296 = vmatprep.subr.mxu0 %v250
  %297 = vmatpush1.msra.mxu0 %v249
  %298 = vmatprep.subr.mxu0 %v248
  %299 = vmatpush1.msra.mxu0 %v247
  %300 = vmatprep.subr.mxu0 0.0
  %301 = vmatpush2.msra.mxu0 0.0
  %302 = vmatprep.subr.mxu0 0.0
  %303 = vmatpush2.msra.mxu0 0.0
  %304 = vmatprep.subr.mxu0 0.0
  %305 = vmatpush2.msra.mxu0 0.0
  %306 = vmatprep.subr.mxu0 0.0
  %307 = vmatpush2.msra.mxu0 0.0
  %308 = vmatprep.subr.mxu0 0.0
  %309 = vmatpush2.msra.mxu0 0.0
  %310 = vmatprep.subr.mxu0 0.0
  %311 = vmatpush2.msra.mxu0 0.0
  %312 = vmatprep.subr.mxu0 0.0
  %313 = vmatpush2.msra.mxu0 0.0
  %314 = vmatprep.subr.mxu0 0.0
  %315 = vmatpush2.msra.mxu0 0.0
  %316 = vmatprep.subr.mxu0 0.0
  %317 = vmatpush2.msra.mxu0 0.0
  %318 = vmatprep.subr.mxu0 0.0
  %319 = vmatpush2.msra.mxu0 0.0
  %320 = vmatprep.subr.mxu0 0.0
  %321 = vmatpush2.msra.mxu0 0.0
  %322 = vmatprep.subr.mxu0 0.0
  %323 = vmatpush2.msra.mxu0 0.0
  %324 = vmatprep.subr.mxu0 0.0
  %325 = vmatpush2.msra.mxu0 0.0
  %326 = vmatprep.subr.mxu0 0.0
  %327 = vmatpush2.msra.mxu0 0.0
  %328 = vmatprep.subr.mxu0 0.0
  %329 = vmatpush2.msra.mxu0 0.0
  %330 = vmatprep.subr.mxu0 0.0
  %331 = vmatpush2.msra.mxu0 0.0
  %332 = vmatprep.mubr.f32.mxu0 0.0
  %333 = vmatmul.mubr.f32.gmra.mxu0 %v257
  %v334 = vpop.f32.mrf.mxu0
  %v335 = vadd.f32 0.0, %v334
  %v336 = vpop.f32.mrf.mxu0
  %v337 = vadd.f32 0.0, %v336
  %338 = vmatprep.mubr.f32.mxu0 0.0
  %339 = vmatmul.mubr.f32.gmra.mxu0 %v260
  %v340 = vpop.f32.mrf.mxu0
  %v341 = vadd.f32 0.0, %v340
  %v342 = vpop.f32.mrf.mxu0
  %v343 = vadd.f32 0.0, %v342
  %344 = vmatprep.mubr.f32.mxu0 0.0
  %345 = vmatmul.mubr.f32.gmra.mxu0 %v263
  %v346 = vpop.f32.mrf.mxu0
  %v347 = vadd.f32 0.0, %v346
  %v348 = vpop.f32.mrf.mxu0
  %v349 = vadd.f32 0.0, %v348
  %350 = vmatprep.mubr.f32.mxu0 0.0
  %351 = vmatmul.mubr.f32.gmra.mxu0 %v266
  %v352 = vpop.f32.mrf.mxu0
  %v353 = vadd.f32 0.0, %v352
  %v354 = vpop.f32.mrf.mxu0
  %v355 = vadd.f32 0.0, %v354
  %356 = vdwg.mxu0
  %v358 = vsel %vm255, %v113, 0
  %v361 = vsel %vm255, %v118, 0
  %v364 = vsel %vm255, %v210, 0
  %v367 = vsel %vm255, %v215, 0
  %369 = vmatprep.subr.mxu0 0.0
  %370 = vmatpush1.msra.mxu0 0.0
  %371 = vmatprep.subr.mxu0 0.0
  %372 = vmatpush1.msra.mxu0 0.0
  %373 = vmatprep.subr.mxu0 0.0
  %374 = vmatpush1.msra.mxu0 0.0
  %375 = vmatprep.subr.mxu0 0.0
  %376 = vmatpush1.msra.mxu0 0.0
  %377 = vmatprep.subr.mxu0 0.0
  %378 = vmatpush1.msra.mxu0 0.0
  %379 = vmatprep.subr.mxu0 0.0
  %380 = vmatpush1.msra.mxu0 0.0
  %381 = vmatprep.subr.mxu0 0.0
  %382 = vmatpush1.msra.mxu0 0.0
  %383 = vmatprep.subr.mxu0 0.0
  %384 = vmatpush1.msra.mxu0 0.0
  %385 = vmatprep.subr.mxu0 0.0
  %386 = vmatpush1.msra.mxu0 0.0
  %387 = vmatprep.subr.mxu0 0.0
  %388 = vmatpush1.msra.mxu0 0.0
  %389 = vmatprep.subr.mxu0 0.0
  %390 = vmatpush1.msra.mxu0 0.0
  %391 = vmatprep.subr.mxu0 0.0
  %392 = vmatpush1.msra.mxu0 0.0
  %393 = vmatprep.subr.mxu0 %v245
  %394 = vmatpush1.msra.mxu0 %v244
  %395 = vmatprep.subr.mxu0 %v243
  %396 = vmatpush1.msra.mxu0 %v242
  %397 = vmatprep.subr.mxu0 %v241
  %398 = vmatpush1.msra.mxu0 %v240
  %399 = vmatprep.subr.mxu0 %v239
  %400 = vmatpush1.msra.mxu0 %v238
  %401 = vmatprep.subr.mxu0 0.0
  %402 = vmatpush2.msra.mxu0 0.0
  %403 = vmatprep.subr.mxu0 0.0
  %404 = vmatpush2.msra.mxu0 0.0
  %405 = vmatprep.subr.mxu0 0.0
  %406 = vmatpush2.msra.mxu0 0.0
  %407 = vmatprep.subr.mxu0 0.0
  %408 = vmatpush2.msra.mxu0 0.0
  %409 = vmatprep.subr.mxu0 0.0
  %410 = vmatpush2.msra.mxu0 0.0
  %411 = vmatprep.subr.mxu0 0.0
  %412 = vmatpush2.msra.mxu0 0.0
  %413 = vmatprep.subr.mxu0 0.0
  %414 = vmatpush2.msra.mxu0 0.0
  %415 = vmatprep.subr.mxu0 0.0
  %416 = vmatpush2.msra.mxu0 0.0
  %417 = vmatprep.subr.mxu0 0.0
  %418 = vmatpush2.msra.mxu0 0.0
  %419 = vmatprep.subr.mxu0 0.0
  %420 = vmatpush2.msra.mxu0 0.0
  %421 = vmatprep.subr.mxu0 0.0
  %422 = vmatpush2.msra.mxu0 0.0
  %423 = vmatprep.subr.mxu0 0.0
  %424 = vmatpush2.msra.mxu0 0.0
  %425 = vmatprep.subr.mxu0 0.0
  %426 = vmatpush2.msra.mxu0 0.0
  %427 = vmatprep.subr.mxu0 0.0
  %428 = vmatpush2.msra.mxu0 0.0
  %429 = vmatprep.subr.mxu0 0.0
  %430 = vmatpush2.msra.mxu0 0.0
  %431 = vmatprep.subr.mxu0 0.0
  %432 = vmatpush2.msra.mxu0 0.0
  %433 = vmatprep.mubr.f32.mxu0 0.0
  %434 = vmatmul.mubr.f32.gmra.mxu0 %v358
  %v435 = vpop.f32.mrf.mxu0
  %v436 = vadd.f32 %v335, %v435
  %v437 = vpop.f32.mrf.mxu0
  %v438 = vadd.f32 %v337, %v437
  %439 = vmatprep.mubr.f32.mxu0 0.0
  %440 = vmatmul.mubr.f32.gmra.mxu0 %v361
  %v441 = vpop.f32.mrf.mxu0
  %v442 = vadd.f32 %v341, %v441
  %v443 = vpop.f32.mrf.mxu0
  %v444 = vadd.f32 %v343, %v443
  %445 = vmatprep.mubr.f32.mxu0 0.0
  %446 = vmatmul.mubr.f32.gmra.mxu0 %v364
  %v447 = vpop.f32.mrf.mxu0
  %v448 = vadd.f32 %v347, %v447
  %v449 = vpop.f32.mrf.mxu0
  %v450 = vadd.f32 %v349, %v449
  %451 = vmatprep.mubr.f32.mxu0 0.0
  %452 = vmatmul.mubr.f32.gmra.mxu0 %v367
  %v453 = vpop.f32.mrf.mxu0
  %v454 = vadd.f32 %v353, %v453
  %v455 = vpop.f32.mrf.mxu0
  %v456 = vadd.f32 %v355, %v455
  %457 = vdwg.mxu0
  %s458 = scalar_lea.vmem %s3, 128
  %v459 = vld [vmem:[%s458] sm:$0xff]
  %v460 = vld [vmem:[%s458 + $0x8] sm:$0xff]
  %v461 = vld [vmem:[%s458 + $0x10] sm:$0xff]
  %v462 = vld [vmem:[%s458 + $0x18] sm:$0xff]
  %v463 = vld [vmem:[%s458 + $0x20] sm:$0xff]
  %v464 = vld [vmem:[%s458 + $0x28] sm:$0xff]
  %v465 = vld [vmem:[%s458 + $0x30] sm:$0xff]
  %v466 = vld [vmem:[%s458 + $0x38] sm:$0xff]
  %v468 = vsel %vm255, %v133, 0
  %v471 = vsel %vm255, %v138, 0
  %v474 = vsel %vm255, %v230, 0
  %v477 = vsel %vm255, %v235, 0
  %479 = vmatprep.subr.mxu0 0.0
  %480 = vmatpush1.msra.mxu0 0.0
  %481 = vmatprep.subr.mxu0 0.0
  %482 = vmatpush1.msra.mxu0 0.0
  %483 = vmatprep.subr.mxu0 0.0
  %484 = vmatpush1.msra.mxu0 0.0
  %485 = vmatprep.subr.mxu0 0.0
  %486 = vmatpush1.msra.mxu0 0.0
  %487 = vmatprep.subr.mxu0 0.0
  %488 = vmatpush1.msra.mxu0 0.0
  %489 = vmatprep.subr.mxu0 0.0
  %490 = vmatpush1.msra.mxu0 0.0
  %491 = vmatprep.subr.mxu0 0.0
  %492 = vmatpush1.msra.mxu0 0.0
  %493 = vmatprep.subr.mxu0 0.0
  %494 = vmatpush1.msra.mxu0 0.0
  %495 = vmatprep.subr.mxu0 0.0
  %496 = vmatpush1.msra.mxu0 0.0
  %497 = vmatprep.subr.mxu0 0.0
  %498 = vmatpush1.msra.mxu0 0.0
  %499 = vmatprep.subr.mxu0 0.0
  %500 = vmatpush1.msra.mxu0 0.0
  %501 = vmatprep.subr.mxu0 0.0
  %502 = vmatpush1.msra.mxu0 0.0
  %503 = vmatprep.subr.mxu0 %v466
  %504 = vmatpush1.msra.mxu0 %v465
  %505 = vmatprep.subr.mxu0 %v464
  %506 = vmatpush1.msra.mxu0 %v463
  %507 = vmatprep.subr.mxu0 %v462
  %508 = vmatpush1.msra.mxu0 %v461
  %509 = vmatprep.subr.mxu0 %v460
  %510 = vmatpush1.msra.mxu0 %v459
  %511 = vmatprep.subr.mxu0 0.0
  %512 = vmatpush2.msra.mxu0 0.0
  %513 = vmatprep.subr.mxu0 0.0
  %514 = vmatpush2.msra.mxu0 0.0
  %515 = vmatprep.subr.mxu0 0.0
  %516 = vmatpush2.msra.mxu0 0.0
  %517 = vmatprep.subr.mxu0 0.0
  %518 = vmatpush2.msra.mxu0 0.0
  %519 = vmatprep.subr.mxu0 0.0
  %520 = vmatpush2.msra.mxu0 0.0
  %521 = vmatprep.subr.mxu0 0.0
  %522 = vmatpush2.msra.mxu0 0.0
  %523 = vmatprep.subr.mxu0 0.0
  %524 = vmatpush2.msra.mxu0 0.0
  %525 = vmatprep.subr.mxu0 0.0
  %526 = vmatpush2.msra.mxu0 0.0
  %527 = vmatprep.subr.mxu0 0.0
  %528 = vmatpush2.msra.mxu0 0.0
  %529 = vmatprep.subr.mxu0 0.0
  %530 = vmatpush2.msra.mxu0 0.0
  %531 = vmatprep.subr.mxu0 0.0
  %532 = vmatpush2.msra.mxu0 0.0
  %533 = vmatprep.subr.mxu0 0.0
  %534 = vmatpush2.msra.mxu0 0.0
  %535 = vmatprep.subr.mxu0 0.0
  %536 = vmatpush2.msra.mxu0 0.0
  %537 = vmatprep.subr.mxu0 0.0
  %538 = vmatpush2.msra.mxu0 0.0
  %539 = vmatprep.subr.mxu0 0.0
  %540 = vmatpush2.msra.mxu0 0.0
  %541 = vmatprep.subr.mxu0 0.0
  %542 = vmatpush2.msra.mxu0 0.0
  %543 = vmatprep.mubr.f32.mxu0 0.0
  %544 = vmatmul.mubr.f32.gmra.mxu0 %v468
  %v545 = vpop.f32.mrf.mxu0
  %v546 = vadd.f32 0.0, %v545
  %v547 = vpop.f32.mrf.mxu0
  %v548 = vadd.f32 0.0, %v547
  %549 = vmatprep.mubr.f32.mxu0 0.0
  %550 = vmatmul.mubr.f32.gmra.mxu0 %v471
  %v551 = vpop.f32.mrf.mxu0
  %v552 = vadd.f32 0.0, %v551
  %v553 = vpop.f32.mrf.mxu0
  %v554 = vadd.f32 0.0, %v553
  %555 = vmatprep.mubr.f32.mxu0 0.0
  %556 = vmatmul.mubr.f32.gmra.mxu0 %v474
  %v557 = vpop.f32.mrf.mxu0
  %v558 = vadd.f32 0.0, %v557
  %v559 = vpop.f32.mrf.mxu0
  %v560 = vadd.f32 0.0, %v559
  %561 = vmatprep.mubr.f32.mxu0 0.0
  %562 = vmatmul.mubr.f32.gmra.mxu0 %v477
  %v563 = vpop.f32.mrf.mxu0
  %v564 = vadd.f32 0.0, %v563
  %v565 = vpop.f32.mrf.mxu0
  %v566 = vadd.f32 0.0, %v565
  %567 = vdwg.mxu0
  %v568 = vadd.f32 %v436, %v546
  %v569 = vadd.f32 %v438, %v548
  %v570 = vadd.f32 %v442, %v552
  %v571 = vadd.f32 %v444, %v554
  %v572 = vadd.f32 %v448, %v558
  %v573 = vadd.f32 %v450, %v560
  %v574 = vadd.f32 %v454, %v564
  %v575 = vadd.f32 %v456, %v566
  %v576 = vld [vmem:[%s4] sm:$0x3]
  %v578 = vlaneseq
  %v579 = vshrl.u32 %v578, 7
  %v580 = vsub.s32 0, %v579
  %v581 = vrot.slane %v576, %v580
  %v582 = vlaneseq
  %v583 = vshrl.u32 %v582, 7
  %v584 = vsub.s32 1, %v583
  %v585 = vrot.slane %v576, %v584
  %v588 = vadd.f32 %v568, %v581
  %v589 = vadd.f32 %v569, %v585
  %v590 = vadd.f32 %v570, %v581
  %v591 = vadd.f32 %v571, %v585
  %v592 = vadd.f32 %v572, %v581
  %v593 = vadd.f32 %v573, %v585
  %v594 = vadd.f32 %v574, %v581
  %v595 = vadd.f32 %v575, %v585
  %v596 = vld [vmem:[%s0] sm:$0xff]
  %v597 = vld [vmem:[%s0 + $0x8] sm:$0xff]
  %v598 = vld [vmem:[%s0 + $0x10] sm:$0xff]
  %v599 = vld [vmem:[%s0 + $0x18] sm:$0xff]
  %v600 = vmul.f32 %v588, %v596
  %v601 = vmul.f32 %v590, %v597
  %v602 = vmul.f32 %v592, %v598
  %v603 = vmul.f32 %v594, %v599
  %v604 = vadd.f32 %v600, %v589
  %v605 = vadd.f32 %v601, %v591
  %v606 = vadd.f32 %v602, %v593
  %v607 = vadd.f32 %v603, %v595
  %608 = vst [vmem:[%s5] sm:$0xff] %v604
  %609 = vst [vmem:[%s5 + $0x8] sm:$0xff] %v605
  %610 = vst [vmem:[%s5 + $0x10] sm:$0xff] %v606
  %611 = vst [vmem:[%s5 + $0x18] sm:$0xff] %v607
  // Predicated region
  $region22: #{spatial_film_forward.1} parent=0 // pred_check
    _
  $region23: #{spatial_film_forward.1} parent=0 // pred_check_branch
    %613 = sbr.rel (0) target = $region25
  $region24: #{spatial_film_forward.1} parent=0 // pred_region
    _
  $region25: #{spatial_film_forward.1} parent=0 // pred_fallthru
    _
  // Predicated region
  $region26: #{spatial_film_forward.1} parent=0 // pred_check
    _
  $region27: #{spatial_film_forward.1} parent=0 // pred_check_branch
    %615 = sbr.rel (0) target = $region29
  $region28: #{spatial_film_forward.1} parent=0 // pred_region
    _
  $region29: #{spatial_film_forward.1} parent=0 // pred_fallthru
    _

</llo_original>
